<compile_context>
chip_gen: v6e
topology: v6e:2x2x1
jax: 0.10.0
libtpu: 0.0.40
codegen_flags: <defaults>
</compile_context>

<pallas_src>
import functools

import jax
import jax.numpy as jnp
from jax.experimental import pallas as pl
from jax.experimental.pallas import tpu as pltpu


def _cdiv(a, b):
    return (a + b - 1) // b


def _round_up(x, m):
    return _cdiv(x, m) * m


def _pick_tile(full, align, max_tile):
    """Pick (tile, n_blocks, padded_dim).

    tile is a multiple of `align`; over-padding is bounded by < one tile
    (and by one `align` unit per block), instead of rounding the whole
    dimension up to a multiple of max_tile.
    """
    full_a = _round_up(full, align)
    if full_a <= max_tile:
        return full_a, 1, full_a
    n_blocks = _cdiv(full_a, max_tile)
    tile = _round_up(_cdiv(full_a, n_blocks), align)
    return tile, n_blocks, tile * n_blocks


def _dqn_head_kernel(a_ref, b_ref, c_ref, wa_ref, wb_ref, wc_ref, bias_ref, o_ref):
    """One (tm, tn) output tile: three full-K MXU contractions + bias + ReLU.

    No K grid axis, no VMEM accumulator scratch, no init/finalize branches:
    the f32 accumulator lives in registers and the epilogue is fused into the
    single lane-dense store.
    """
    acc = jnp.dot(a_ref[...], wa_ref[...], preferred_element_type=jnp.float32)
    acc = acc + jnp.dot(b_ref[...], wb_ref[...], preferred_element_type=jnp.float32)
    acc = acc + jnp.dot(c_ref[...], wc_ref[...], preferred_element_type=jnp.float32)
    out = acc + bias_ref[...]                       # (1, tn) broadcasts over tm
    o_ref[...] = jnp.maximum(out, 0.0).astype(o_ref.dtype)


def make_func2(wa, wb, wc, bias, *, tm_max=256, tn_max=512,
               compute_dtype=jnp.float32):
    """Build forward(a, b, c) = relu(a@Wa + b@Wb + c@Wc + bias).

    Static-parameter padding (N -> multiple of 128) happens ONCE here, not in
    the per-call jitted path.  Set compute_dtype=jnp.bfloat16 on v6e/v7x for
    ~2-4x MXU throughput (relax validation tolerance accordingly).
    """
    wa = jnp.asarray(wa)
    wb = jnp.asarray(wb)
    wc = jnp.asarray(wc)
    n_out = wa.shape[1]
    assert wb.shape[1] == n_out and wc.shape[1] == n_out
    d_a, d_b, d_c = wa.shape[0], wb.shape[0], wc.shape[0]
    k_total = d_a + d_b + d_c

    # Accept (D_out,) or (1, D_out) bias.
    bias2 = jnp.asarray(bias).reshape(1, n_out).astype(jnp.float32)

    # ---- N tiling + one-time weight/bias padding (static params).
    tn0, grid_n0, n_pad = _pick_tile(n_out, 128, tn_max)
    pad_n = n_pad - n_out
    wa_p = jnp.pad(wa, ((0, 0), (0, pad_n))).astype(compute_dtype)
    wb_p = jnp.pad(wb, ((0, 0), (0, pad_n))).astype(compute_dtype)
    wc_p = jnp.pad(wc, ((0, 0), (0, pad_n))).astype(compute_dtype)
    bias_p = jnp.pad(bias2, ((0, 0), (0, pad_n)))

    in_itemsize = jnp.dtype(compute_dtype).itemsize

    # TODO(synk): if K were ever too large for full-K VMEM blocks (not the case
    # for DQN heads), a K grid axis accumulating directly into o_ref would be
    # needed here.

    @jax.jit
    def forward(a, b, c):
        B = a.shape[0]
        tm, grid_m, m_pad = _pick_tile(B, 8, tm_max)
        tn, grid_n = tn0, grid_n0

        # v7x megacore: guarantee >=2 "parallel" blocks for non-tiny problems
        # so the second TensorCore is not idle (no-op on v5e/v6e: 1 TC).
        flops = 2 * m_pad * n_pad * k_total
        if grid_m * grid_n == 1 and flops >= (1 << 23):
            if tm % 16 == 0 and tm >= 16:
                tm, grid_m = tm // 2, 2
            elif tn % 256 == 0 and tn >= 256:
                tn, grid_n = tn // 2, 2

        def pad_m(x):
            x = x.astype(compute_dtype)
            if m_pad == B:
                return x
            return jnp.pad(x, ((0, m_pad - B), (0, 0)))

        a_p, b_p, c_p = pad_m(a), pad_m(b), pad_m(c)

        # Bytes: activations re-read grid_n times, weights re-read grid_m
        # times, output written once, bias read per n-block.
        cost = pl.CostEstimate(
            flops=flops,
            bytes_accessed=int(
                in_itemsize * (grid_n * m_pad * k_total + grid_m * k_total * n_pad)
                + 4 * (m_pad * n_pad + grid_n * n_pad)
            ),
            transcendentals=0,
        )

        # Double-buffered inputs + double-buffered output tile, with headroom;
        # capped well under v7x's 64 MiB physical VMEM.
        tile_bytes = (in_itemsize * (tm * k_total + k_total * tn)
                      + 4 * (tn + tm * tn))
        vmem_limit = int(min(48 << 20, max(32 << 20, 2 * tile_bytes + (4 << 20))))

        out_p = pl.pallas_call(
            _dqn_head_kernel,
            out_shape=jax.ShapeDtypeStruct((m_pad, n_pad), jnp.float32),
            grid_spec=pltpu.PrefetchScalarGridSpec(
                num_scalar_prefetch=0,
                grid=(grid_m, grid_n),
                in_specs=[
                    pl.BlockSpec((tm, d_a), lambda i, j: (i, 0)),   # a tile (full K)
                    pl.BlockSpec((tm, d_b), lambda i, j: (i, 0)),   # b tile
                    pl.BlockSpec((tm, d_c), lambda i, j: (i, 0)),   # c tile
                    pl.BlockSpec((d_a, tn), lambda i, j: (0, j)),   # Wa tile (full K)
                    pl.BlockSpec((d_b, tn), lambda i, j: (0, j)),   # Wb tile
                    pl.BlockSpec((d_c, tn), lambda i, j: (0, j)),   # Wc tile
                    pl.BlockSpec((1, tn), lambda i, j: (0, j)),     # bias tile
                ],
                out_specs=pl.BlockSpec((tm, tn), lambda i, j: (i, j)),
            ),
            compiler_params=pltpu.CompilerParams(
                dimension_semantics=("parallel", "parallel"),
                vmem_limit_bytes=vmem_limit,
            ),
            cost_estimate=cost,
        )(a_p, b_p, c_p, wa_p, wb_p, wc_p, bias_p)

        # Skip the slice copy entirely when no padding was added.
        if m_pad == B and n_pad == n_out:
            return out_p
        return out_p[:B, :n_out]

    return forward


def _reference(a, b, c, wa, wb, wc, bias):
    bias2 = jnp.asarray(bias).reshape(1, -1)
    return jnp.maximum(a @ wa + b @ wb + c @ wc + bias2, 0.0)


if __name__ == "__main__":
    key = jax.random.PRNGKey(0)

    # ---- Small DQN-head shapes (fast path: single full-array block, grid 1x1).
    B, D_in, D_out = 8, 32, 32
    ka, kb, kc, kwa, kwb, kwc, kbias = jax.random.split(key, 7)
    a = jax.random.normal(ka, (B, D_in), dtype=jnp.float32)
    b = jax.random.normal(kb, (B, D_in), dtype=jnp.float32)
    c = jax.random.normal(kc, (B, D_in), dtype=jnp.float32)
    wa = jax.random.normal(kwa, (D_in, D_out), dtype=jnp.float32) * 0.1
    wb = jax.random.normal(kwb, (D_in, D_out), dtype=jnp.float32) * 0.1
    wc = jax.random.normal(kwc, (D_in, D_out), dtype=jnp.float32) * 0.1
    bias = jax.random.normal(kbias, (D_out,), dtype=jnp.float32) * 0.01  # 1-D bias

    fwd = make_func2(wa, wb, wc, bias)
    out = fwd(a, b, c)
    jax.block_until_ready(out)
    ref = _reference(a, b, c, wa, wb, wc, bias)
    assert out.shape == (B, D_out)
    assert jnp.allclose(out, ref, atol=1e-4, rtol=1e-4)

    # ---- Medium shapes with unequal per-input K (tiled path, grid_m > 1).
    B2, Da, Db, Dc, N2 = 260, 32, 48, 64, 200
    k2 = jax.random.PRNGKey(1)
    k2a, k2b, k2c, k2wa, k2wb, k2wc, k2bias = jax.random.split(k2, 7)
    a2 = jax.random.normal(k2a, (B2, Da), dtype=jnp.float32)
    b2 = jax.random.normal(k2b, (B2, Db), dtype=jnp.float32)
    c2 = jax.random.normal(k2c, (B2, Dc), dtype=jnp.float32)
    wa2 = jax.random.normal(k2wa, (Da, N2), dtype=jnp.float32) * 0.05
    wb2 = jax.random.normal(k2wb, (Db, N2), dtype=jnp.float32) * 0.05
    wc2 = jax.random.normal(k2wc, (Dc, N2), dtype=jnp.float32) * 0.05
    bias2 = jax.random.normal(k2bias, (1, N2), dtype=jnp.float32) * 0.01  # 2-D bias

    fwd2 = make_func2(wa2, wb2, wc2, bias2)
    out2 = fwd2(a2, b2, c2)
    jax.block_until_ready(out2)
    ref2 = _reference(a2, b2, c2, wa2, wb2, wc2, bias2)
    assert out2.shape == (B2, N2)
    assert jnp.allclose(out2, ref2, atol=1e-4, rtol=1e-4)

    print("KERNEL_OK")
</pallas_src>

<mosaic_0001>
module attributes {stable_mosaic.version = 11 : i64} {
  func.func @_dqn_head_kernel(%arg0: i32, %arg1: i32, %arg2: memref<8x32xf32, #tpu.memory_space<vmem>>, %arg3: memref<8x32xf32, #tpu.memory_space<vmem>>, %arg4: memref<8x32xf32, #tpu.memory_space<vmem>>, %arg5: memref<32x128xf32, #tpu.memory_space<vmem>>, %arg6: memref<32x128xf32, #tpu.memory_space<vmem>>, %arg7: memref<32x128xf32, #tpu.memory_space<vmem>>, %arg8: memref<1x128xf32, #tpu.memory_space<vmem>>, %arg9: memref<8x128xf32, #tpu.memory_space<vmem>>) attributes {dimension_semantics = [#tpu.dimension_semantics<parallel>, #tpu.dimension_semantics<parallel>], iteration_bounds = array<i64: 1, 1>, scalar_prefetch = 0 : i64, scratch_operands = 0 : i64, tpu.core_type = #tpu.core_type<tc>, window_params = [{transform_indices = @transform_0, window_bounds = array<i64: 8, 32>}, {transform_indices = @transform_1, window_bounds = array<i64: 8, 32>}, {transform_indices = @transform_2, window_bounds = array<i64: 8, 32>}, {transform_indices = @transform_3, window_bounds = array<i64: 32, 128>}, {transform_indices = @transform_4, window_bounds = array<i64: 32, 128>}, {transform_indices = @transform_5, window_bounds = array<i64: 32, 128>}, {transform_indices = @transform_6, window_bounds = array<i64: 1, 128>}, {transform_indices = @transform_7, window_bounds = array<i64: 8, 128>}]} {
    %c0 = arith.constant 0 : index
    %c0_0 = arith.constant 0 : index
    %0 = vector.load %arg2[%c0, %c0_0] : memref<8x32xf32, #tpu.memory_space<vmem>>, vector<8x32xf32>
    %c0_1 = arith.constant 0 : index
    %c0_2 = arith.constant 0 : index
    %1 = vector.load %arg5[%c0_1, %c0_2] : memref<32x128xf32, #tpu.memory_space<vmem>>, vector<32x128xf32>
    %cst = arith.constant dense<0.000000e+00> : vector<8x128xf32>
    %2 = tpu.matmul %0, %1, %cst {dimension_numbers = #tpu.dot_dimension_numbers<[1], [0], [0], [1], [0, 0, 1, 1], [], []>} : vector<8x32xf32>, vector<32x128xf32>, vector<8x128xf32> -> vector<8x128xf32>
    %c0_3 = arith.constant 0 : index
    %c0_4 = arith.constant 0 : index
    %3 = vector.load %arg3[%c0_3, %c0_4] : memref<8x32xf32, #tpu.memory_space<vmem>>, vector<8x32xf32>
    %c0_5 = arith.constant 0 : index
    %c0_6 = arith.constant 0 : index
    %4 = vector.load %arg6[%c0_5, %c0_6] : memref<32x128xf32, #tpu.memory_space<vmem>>, vector<32x128xf32>
    %cst_7 = arith.constant dense<0.000000e+00> : vector<8x128xf32>
    %5 = tpu.matmul %3, %4, %cst_7 {dimension_numbers = #tpu.dot_dimension_numbers<[1], [0], [0], [1], [0, 0, 1, 1], [], []>} : vector<8x32xf32>, vector<32x128xf32>, vector<8x128xf32> -> vector<8x128xf32>
    %6 = arith.addf %2, %5 : vector<8x128xf32>
    %c0_8 = arith.constant 0 : index
    %c0_9 = arith.constant 0 : index
    %7 = vector.load %arg4[%c0_8, %c0_9] : memref<8x32xf32, #tpu.memory_space<vmem>>, vector<8x32xf32>
    %c0_10 = arith.constant 0 : index
    %c0_11 = arith.constant 0 : index
    %8 = vector.load %arg7[%c0_10, %c0_11] : memref<32x128xf32, #tpu.memory_space<vmem>>, vector<32x128xf32>
    %cst_12 = arith.constant dense<0.000000e+00> : vector<8x128xf32>
    %9 = tpu.matmul %7, %8, %cst_12 {dimension_numbers = #tpu.dot_dimension_numbers<[1], [0], [0], [1], [0, 0, 1, 1], [], []>} : vector<8x32xf32>, vector<32x128xf32>, vector<8x128xf32> -> vector<8x128xf32>
    %10 = arith.addf %6, %9 : vector<8x128xf32>
    %c0_13 = arith.constant 0 : index
    %c0_14 = arith.constant 0 : index
    %11 = vector.load %arg8[%c0_13, %c0_14] : memref<1x128xf32, #tpu.memory_space<vmem>>, vector<1x128xf32>
    %12 = vector.broadcast %11 : vector<1x128xf32> to vector<8x128xf32>
    %13 = arith.addf %10, %12 : vector<8x128xf32>
    %cst_15 = arith.constant 0.000000e+00 : f32
    %14 = vector.broadcast %cst_15 : f32 to vector<8x128xf32>
    %15 = arith.maximumf %13, %14 : vector<8x128xf32>
    %c0_16 = arith.constant 0 : index
    %c0_17 = arith.constant 0 : index
    %16 = vector.load %arg9[%c0_16, %c0_17] : memref<8x128xf32, #tpu.memory_space<vmem>>, vector<8x128xf32>
    tpu.vector_store %arg9[%c0_16, %c0_17], %15 {strides = array<i32>} : memref<8x128xf32, #tpu.memory_space<vmem>>, vector<8x128xf32>,
    return
  }
  func.func @transform_0(%arg0: i32, %arg1: i32) -> (i32, i32) {
    %c0_i32 = arith.constant 0 : i32
    %c0_i32_0 = arith.constant 0 : i32
    return %arg0, %c0_i32 : i32, i32
  }
  func.func @transform_1(%arg0: i32, %arg1: i32) -> (i32, i32) {
    %c0_i32 = arith.constant 0 : i32
    %c0_i32_0 = arith.constant 0 : i32
    return %arg0, %c0_i32 : i32, i32
  }
  func.func @transform_2(%arg0: i32, %arg1: i32) -> (i32, i32) {
    %c0_i32 = arith.constant 0 : i32
    %c0_i32_0 = arith.constant 0 : i32
    return %arg0, %c0_i32 : i32, i32
  }
  func.func @transform_3(%arg0: i32, %arg1: i32) -> (i32, i32) {
    %c0_i32 = arith.constant 0 : i32
    %c0_i32_0 = arith.constant 0 : i32
    return %c0_i32, %arg1 : i32, i32
  }
  func.func @transform_4(%arg0: i32, %arg1: i32) -> (i32, i32) {
    %c0_i32 = arith.constant 0 : i32
    %c0_i32_0 = arith.constant 0 : i32
    return %c0_i32, %arg1 : i32, i32
  }
  func.func @transform_5(%arg0: i32, %arg1: i32) -> (i32, i32) {
    %c0_i32 = arith.constant 0 : i32
    %c0_i32_0 = arith.constant 0 : i32
    return %c0_i32, %arg1 : i32, i32
  }
  func.func @transform_6(%arg0: i32, %arg1: i32) -> (i32, i32) {
    %c0_i32 = arith.constant 0 : i32
    %c0_i32_0 = arith.constant 0 : i32
    return %c0_i32, %arg1 : i32, i32
  }
  func.func @transform_7(%arg0: i32, %arg1: i32) -> (i32, i32) {
    %c0_i32 = arith.constant 0 : i32
    return %arg0, %arg1 : i32, i32
  }
}

</mosaic_0001>

<llo_original>
// kernel: forward.1
$region0: #{forward.1}
  #allocation0 [shape = 'u32[]', space=smem, size = 0x4, offset = 0x4, fixed_abs, tag = 'smem constant byte address 0x4 - core index']
  #allocation1 [shape = 'u32[144,128]{1,0:T(1,128)}', space=vmem, size = 0x12000, scoped, tag = 'internal scratch']
  %s0 = inlined_call_operand.hbm [shape: f32[8,32], index: 0, kind: input, shape index: {}]
  %s1 = inlined_call_operand.hbm [shape: f32[8,32], index: 1, kind: input, shape index: {}]
  %s2 = inlined_call_operand.hbm [shape: f32[8,32], index: 2, kind: input, shape index: {}]
  %s3 = inlined_call_operand.hbm [shape: f32[32,128], index: 3, kind: input, shape index: {}]
  %s4 = inlined_call_operand.hbm [shape: f32[32,128], index: 4, kind: input, shape index: {}]
  %s5 = inlined_call_operand.hbm [shape: f32[32,128], index: 5, kind: input, shape index: {}]
  %s6 = inlined_call_operand.vmem [shape: f32[1,128], index: 6, kind: input, shape index: {}]
  %s7 = inlined_call_operand.hbm [shape: f32[8,128], index: 7, kind: output, shape index: {}]
  %s8 = sld [smem:[#allocation0]]
  $region62: #{forward.1} parent=0
    _
  %s10 = ssub.s32 1, %s8
  %s11 = scalar_select 0, %s10, %s8
  $region1: #{forward.1} parent=0
    #allocation2 [shape = 'u8[4096]{0}', space=vmem, size = 0x1000, scoped, tag = 'input window, operand 0, single buffered']
    #allocation3 [shape = 's32[1]{0}', space=sflag, size = 0x4, scoped, tag = 'scoped memory for forward.1']
    #allocation4 [shape = 's32[1]{0}', space=sflag, size = 0x4, scoped, tag = 'scoped memory for forward.1']
    #allocation5 [shape = 'u8[4096]{0}', space=vmem, size = 0x1000, scoped, tag = 'input window, operand 1, single buffered']
    #allocation6 [shape = 's32[1]{0}', space=sflag, size = 0x4, scoped, tag = 'scoped memory for forward.1']
    #allocation7 [shape = 'u8[4096]{0}', space=vmem, size = 0x1000, scoped, tag = 'input window, operand 2, single buffered']
    #allocation8 [shape = 'u8[16384]{0}', space=vmem, size = 0x4000, scoped, tag = 'input window, operand 3, single buffered']
    #allocation9 [shape = 's32[1]{0}', space=sflag, size = 0x4, scoped, tag = 'scoped memory for forward.1']
    #allocation10 [shape = 'u8[16384]{0}', space=vmem, size = 0x4000, scoped, tag = 'input window, operand 4, single buffered']
    #allocation11 [shape = 'u8[16384]{0}', space=vmem, size = 0x4000, scoped, tag = 'input window, operand 5, single buffered']
    #allocation12 [shape = 's32[1]{0}', space=sflag, size = 0x4, scoped, tag = 'scoped memory for forward.1']
    #allocation13 [shape = 'u8[4096]{0}', space=vmem, size = 0x1000, scoped, tag = 'output window, operand 0, single buffered']
    %12 = vsyncpa [#allocation3], 0
    %13 = vsyncpa [#allocation6], 0
    %14 = vsyncpa [#allocation9], 0
    %15 = vsyncpa [#allocation12], 0
    %16 = vsyncpa [#allocation4], 0
    // Predicated region
    $region2: #{forward.1} parent=1 // pred_check
      _
    $region3: #{forward.1} parent=1 // pred_check_branch
      %18 = sbr.rel (0) target = $region5
    $region4: #{forward.1} parent=1 // pred_region
      %s20 = ssub.s32 128, 128
      %21 = vsyncadd [#allocation3], %s20
      %s23 = sshll.u32 [#allocation2], 4
      %s24 = int_to_ptr.vmem [resolvable:$true] %s23
      %26 = dma.hbm_to_vmem [thread:$0]  %s0, 128, %s24, [#allocation3]
    $region5: #{forward.1} parent=1 // pred_fallthru
      _
    // Predicated region
    $region6: #{forward.1} parent=1 // pred_check
      _
    $region7: #{forward.1} parent=1 // pred_check_branch
      %28 = sbr.rel (0) target = $region9
    $region8: #{forward.1} parent=1 // pred_region
      %s30 = ssub.s32 128, 128
      %31 = vsyncadd [#allocation6], %s30
      %s33 = sshll.u32 [#allocation5], 4
      %s34 = int_to_ptr.vmem [resolvable:$true] %s33
      %36 = dma.hbm_to_vmem [thread:$0]  %s1, 128, %s34, [#allocation6]
    $region9: #{forward.1} parent=1 // pred_fallthru
      _
    // Predicated region
    $region10: #{forward.1} parent=1 // pred_check
      _
    $region11: #{forward.1} parent=1 // pred_check_branch
      %38 = sbr.rel (0) target = $region13
    $region12: #{forward.1} parent=1 // pred_region
      %s40 = ssub.s32 128, 128
      %41 = vsyncadd [#allocation6], %s40
      %s43 = sshll.u32 [#allocation7], 4
      %s44 = int_to_ptr.vmem [resolvable:$true] %s43
      %46 = dma.hbm_to_vmem [thread:$0]  %s2, 128, %s44, [#allocation6]
    $region13: #{forward.1} parent=1 // pred_fallthru
      _
    // Predicated region
    $region14: #{forward.1} parent=1 // pred_check
      _
    $region15: #{forward.1} parent=1 // pred_check_branch
      %48 = sbr.rel (0) target = $region17
    $region16: #{forward.1} parent=1 // pred_region
      %s50 = ssub.s32 512, 512
      %51 = vsyncadd [#allocation9], %s50
      %s52 = sshll.u32 [#allocation8], 4
      %s53 = int_to_ptr.vmem [resolvable:$true] %s52
      %58 = dma.hbm_to_vmem [thread:$0]  %s3, 512, %s53, [#allocation9], 128, 128, 8
    $region17: #{forward.1} parent=1 // pred_fallthru
      _
    // Predicated region
    $region18: #{forward.1} parent=1 // pred_check
      _
    $region19: #{forward.1} parent=1 // pred_check_branch
      %60 = sbr.rel (0) target = $region21
    $region20: #{forward.1} parent=1 // pred_region
      %s62 = ssub.s32 512, 512
      %63 = vsyncadd [#allocation9], %s62
      %s64 = sshll.u32 [#allocation10], 4
      %s65 = int_to_ptr.vmem [resolvable:$true] %s64
      %70 = dma.hbm_to_vmem [thread:$0]  %s4, 512, %s65, [#allocation9], 128, 128, 8
    $region21: #{forward.1} parent=1 // pred_fallthru
      _
    // Predicated region
    $region22: #{forward.1} parent=1 // pred_check
      _
    $region23: #{forward.1} parent=1 // pred_check_branch
      %72 = sbr.rel (0) target = $region25
    $region24: #{forward.1} parent=1 // pred_region
      %s74 = ssub.s32 512, 512
      %75 = vsyncadd [#allocation12], %s74
      %s76 = sshll.u32 [#allocation11], 4
      %s77 = int_to_ptr.vmem [resolvable:$true] %s76
      %82 = dma.hbm_to_vmem [thread:$0]  %s5, 512, %s77, [#allocation12], 128, 128, 8
    $region25: #{forward.1} parent=1 // pred_fallthru
      _
    // Predicated region
    $region26: #{forward.1} parent=1 // pred_check
      _
    $region27: #{forward.1} parent=1 // pred_check_branch
      %84 = sbr.rel (0) target = $region29
    $region28: #{forward.1} parent=1 // pred_region
      _
    $region29: #{forward.1} parent=1 // pred_fallthru
      _
    // Predicated region
    $region30: #{forward.1} parent=1 // pred_check
      _
    $region31: #{forward.1} parent=1 // pred_check_branch
      %86 = sbr.rel (0) target = $region33
    $region32: #{forward.1} parent=1 // pred_region
      %87 = dma.done [#allocation3], 128
    $region33: #{forward.1} parent=1 // pred_fallthru
      _
    // Predicated region
    $region34: #{forward.1} parent=1 // pred_check
      _
    $region35: #{forward.1} parent=1 // pred_check_branch
      %89 = sbr.rel (0) target = $region37
    $region36: #{forward.1} parent=1 // pred_region
      %90 = dma.done [#allocation6], 128
    $region37: #{forward.1} parent=1 // pred_fallthru
      _
    // Predicated region
    $region38: #{forward.1} parent=1 // pred_check
      _
    $region39: #{forward.1} parent=1 // pred_check_branch
      %92 = sbr.rel (0) target = $region41
    $region40: #{forward.1} parent=1 // pred_region
      %93 = dma.done [#allocation6], 128
    $region41: #{forward.1} parent=1 // pred_fallthru
      _
    // Predicated region
    $region42: #{forward.1} parent=1 // pred_check
      _
    $region43: #{forward.1} parent=1 // pred_check_branch
      %95 = sbr.rel (0) target = $region45
    $region44: #{forward.1} parent=1 // pred_region
      %96 = dma.done [#allocation9], 512
    $region45: #{forward.1} parent=1 // pred_fallthru
      _
    // Predicated region
    $region46: #{forward.1} parent=1 // pred_check
      _
    $region47: #{forward.1} parent=1 // pred_check_branch
      %98 = sbr.rel (0) target = $region49
    $region48: #{forward.1} parent=1 // pred_region
      %99 = dma.done [#allocation9], 512
    $region49: #{forward.1} parent=1 // pred_fallthru
      _
    // Predicated region
    $region50: #{forward.1} parent=1 // pred_check
      _
    $region51: #{forward.1} parent=1 // pred_check_branch
      %101 = sbr.rel (0) target = $region53
    $region52: #{forward.1} parent=1 // pred_region
      %102 = dma.done [#allocation12], 512
    $region53: #{forward.1} parent=1 // pred_fallthru
      _
    %v103 = vld [vmem:[#allocation2] sm:$0xff]
    %v104 = vld [vmem:[#allocation8] sm:$0xff]
    %v105 = vld [vmem:[#allocation8 + $0x8] sm:$0xff]
    %v106 = vld [vmem:[#allocation8 + $0x10] sm:$0xff]
    %v107 = vld [vmem:[#allocation8 + $0x18] sm:$0xff]
    %v108 = vld [vmem:[#allocation5] sm:$0xff]
    %v109 = vld [vmem:[#allocation10] sm:$0xff]
    %v110 = vld [vmem:[#allocation10 + $0x8] sm:$0xff]
    %v111 = vld [vmem:[#allocation10 + $0x10] sm:$0xff]
    %v112 = vld [vmem:[#allocation10 + $0x18] sm:$0xff]
    %vm113 = vcmask 261120
    %v115 = vsel %vm113, %v108, 0
    %117 = vmatprep.subr.mxu0 0.0
    %118 = vmatpush1.msra.mxu0 0.0
    %119 = vmatprep.subr.mxu0 0.0
    %120 = vmatpush1.msra.mxu0 0.0
    %121 = vmatprep.subr.mxu0 0.0
    %122 = vmatpush1.msra.mxu0 0.0
    %123 = vmatprep.subr.mxu0 0.0
    %124 = vmatpush1.msra.mxu0 0.0
    %125 = vmatprep.subr.mxu0 0.0
    %126 = vmatpush1.msra.mxu0 0.0
    %127 = vmatprep.subr.mxu0 0.0
    %128 = vmatpush1.msra.mxu0 0.0
    %129 = vmatprep.subr.mxu0 0.0
    %130 = vmatpush1.msra.mxu0 0.0
    %131 = vmatprep.subr.mxu0 0.0
    %132 = vmatpush1.msra.mxu0 0.0
    %133 = vmatprep.subr.mxu0 0.0
    %134 = vmatpush1.msra.mxu0 0.0
    %135 = vmatprep.subr.mxu0 0.0
    %136 = vmatpush1.msra.mxu0 0.0
    %137 = vmatprep.subr.mxu0 0.0
    %138 = vmatpush1.msra.mxu0 0.0
    %139 = vmatprep.subr.mxu0 0.0
    %140 = vmatpush1.msra.mxu0 0.0
    %141 = vmatprep.subr.mxu0 0.0
    %142 = vmatpush1.msra.mxu0 %v112
    %143 = vmatprep.subr.mxu0 0.0
    %144 = vmatpush1.msra.mxu0 %v111
    %145 = vmatprep.subr.mxu0 0.0
    %146 = vmatpush1.msra.mxu0 %v110
    %147 = vmatprep.subr.mxu0 0.0
    %148 = vmatpush1.msra.mxu0 %v109
    %149 = vmatprep.subr.mxu0 0.0
    %150 = vmatpush2.msra.mxu0 0.0
    %151 = vmatprep.subr.mxu0 0.0
    %152 = vmatpush2.msra.mxu0 0.0
    %153 = vmatprep.subr.mxu0 0.0
    %154 = vmatpush2.msra.mxu0 0.0
    %155 = vmatprep.subr.mxu0 0.0
    %156 = vmatpush2.msra.mxu0 0.0
    %157 = vmatprep.subr.mxu0 0.0
    %158 = vmatpush2.msra.mxu0 0.0
    %159 = vmatprep.subr.mxu0 0.0
    %160 = vmatpush2.msra.mxu0 0.0
    %161 = vmatprep.subr.mxu0 0.0
    %162 = vmatpush2.msra.mxu0 0.0
    %163 = vmatprep.subr.mxu0 0.0
    %164 = vmatpush2.msra.mxu0 0.0
    %165 = vmatprep.subr.mxu0 0.0
    %166 = vmatpush2.msra.mxu0 0.0
    %167 = vmatprep.subr.mxu0 0.0
    %168 = vmatpush2.msra.mxu0 0.0
    %169 = vmatprep.subr.mxu0 0.0
    %170 = vmatpush2.msra.mxu0 0.0
    %171 = vmatprep.subr.mxu0 0.0
    %172 = vmatpush2.msra.mxu0 0.0
    %173 = vmatprep.subr.mxu0 0.0
    %174 = vmatpush2.msra.mxu0 0.0
    %175 = vmatprep.subr.mxu0 0.0
    %176 = vmatpush2.msra.mxu0 0.0
    %177 = vmatprep.subr.mxu0 0.0
    %178 = vmatpush2.msra.mxu0 0.0
    %179 = vmatprep.subr.mxu0 0.0
    %180 = vmatpush2.msra.mxu0 0.0
    %181 = vmatprep.mubr.f32.mxu0 0.0
    %182 = vmatmul.mubr.f32.gmra.mxu0 %v115
    %v183 = vpop.f32.mrf.mxu0
    %v184 = vadd.f32 0.0, %v183
    %v185 = vpop.f32.mrf.mxu0
    %186 = vdwg.mxu0
    %v188 = vsel %vm113, %v103, 0
    %190 = vmatprep.subr.mxu0 0.0
    %191 = vmatpush1.msra.mxu0 0.0
    %192 = vmatprep.subr.mxu0 0.0
    %193 = vmatpush1.msra.mxu0 0.0
    %194 = vmatprep.subr.mxu0 0.0
    %195 = vmatpush1.msra.mxu0 0.0
    %196 = vmatprep.subr.mxu0 0.0
    %197 = vmatpush1.msra.mxu0 0.0
    %198 = vmatprep.subr.mxu0 0.0
    %199 = vmatpush1.msra.mxu0 0.0
    %200 = vmatprep.subr.mxu0 0.0
    %201 = vmatpush1.msra.mxu0 0.0
    %202 = vmatprep.subr.mxu0 0.0
    %203 = vmatpush1.msra.mxu0 0.0
    %204 = vmatprep.subr.mxu0 0.0
    %205 = vmatpush1.msra.mxu0 0.0
    %206 = vmatprep.subr.mxu0 0.0
    %207 = vmatpush1.msra.mxu0 0.0
    %208 = vmatprep.subr.mxu0 0.0
    %209 = vmatpush1.msra.mxu0 0.0
    %210 = vmatprep.subr.mxu0 0.0
    %211 = vmatpush1.msra.mxu0 0.0
    %212 = vmatprep.subr.mxu0 0.0
    %213 = vmatpush1.msra.mxu0 0.0
    %214 = vmatprep.subr.mxu0 0.0
    %215 = vmatpush1.msra.mxu0 %v107
    %216 = vmatprep.subr.mxu0 0.0
    %217 = vmatpush1.msra.mxu0 %v106
    %218 = vmatprep.subr.mxu0 0.0
    %219 = vmatpush1.msra.mxu0 %v105
    %220 = vmatprep.subr.mxu0 0.0
    %221 = vmatpush1.msra.mxu0 %v104
    %222 = vmatprep.subr.mxu0 0.0
    %223 = vmatpush2.msra.mxu0 0.0
    %224 = vmatprep.subr.mxu0 0.0
    %225 = vmatpush2.msra.mxu0 0.0
    %226 = vmatprep.subr.mxu0 0.0
    %227 = vmatpush2.msra.mxu0 0.0
    %228 = vmatprep.subr.mxu0 0.0
    %229 = vmatpush2.msra.mxu0 0.0
    %230 = vmatprep.subr.mxu0 0.0
    %231 = vmatpush2.msra.mxu0 0.0
    %232 = vmatprep.subr.mxu0 0.0
    %233 = vmatpush2.msra.mxu0 0.0
    %234 = vmatprep.subr.mxu0 0.0
    %235 = vmatpush2.msra.mxu0 0.0
    %236 = vmatprep.subr.mxu0 0.0
    %237 = vmatpush2.msra.mxu0 0.0
    %238 = vmatprep.subr.mxu0 0.0
    %239 = vmatpush2.msra.mxu0 0.0
    %240 = vmatprep.subr.mxu0 0.0
    %241 = vmatpush2.msra.mxu0 0.0
    %242 = vmatprep.subr.mxu0 0.0
    %243 = vmatpush2.msra.mxu0 0.0
    %244 = vmatprep.subr.mxu0 0.0
    %245 = vmatpush2.msra.mxu0 0.0
    %246 = vmatprep.subr.mxu0 0.0
    %247 = vmatpush2.msra.mxu0 0.0
    %248 = vmatprep.subr.mxu0 0.0
    %249 = vmatpush2.msra.mxu0 0.0
    %250 = vmatprep.subr.mxu0 0.0
    %251 = vmatpush2.msra.mxu0 0.0
    %252 = vmatprep.subr.mxu0 0.0
    %253 = vmatpush2.msra.mxu0 0.0
    %254 = vmatprep.mubr.f32.mxu0 0.0
    %255 = vmatmul.mubr.f32.gmra.mxu0 %v188
    %v256 = vpop.f32.mrf.mxu0
    %v257 = vadd.f32 %v184, %v256
    %v258 = vpop.f32.mrf.mxu0
    %259 = vdwg.mxu0
    %v260 = vld [vmem:[#allocation7] sm:$0xff]
    %v261 = vld [vmem:[#allocation11] sm:$0xff]
    %v262 = vld [vmem:[#allocation11 + $0x8] sm:$0xff]
    %v263 = vld [vmem:[#allocation11 + $0x10] sm:$0xff]
    %v264 = vld [vmem:[#allocation11 + $0x18] sm:$0xff]
    %v266 = vsel %vm113, %v260, 0
    %268 = vmatprep.subr.mxu0 0.0
    %269 = vmatpush1.msra.mxu0 0.0
    %270 = vmatprep.subr.mxu0 0.0
    %271 = vmatpush1.msra.mxu0 0.0
    %272 = vmatprep.subr.mxu0 0.0
    %273 = vmatpush1.msra.mxu0 0.0
    %274 = vmatprep.subr.mxu0 0.0
    %275 = vmatpush1.msra.mxu0 0.0
    %276 = vmatprep.subr.mxu0 0.0
    %277 = vmatpush1.msra.mxu0 0.0
    %278 = vmatprep.subr.mxu0 0.0
    %279 = vmatpush1.msra.mxu0 0.0
    %280 = vmatprep.subr.mxu0 0.0
    %281 = vmatpush1.msra.mxu0 0.0
    %282 = vmatprep.subr.mxu0 0.0
    %283 = vmatpush1.msra.mxu0 0.0
    %284 = vmatprep.subr.mxu0 0.0
    %285 = vmatpush1.msra.mxu0 0.0
    %286 = vmatprep.subr.mxu0 0.0
    %287 = vmatpush1.msra.mxu0 0.0
    %288 = vmatprep.subr.mxu0 0.0
    %289 = vmatpush1.msra.mxu0 0.0
    %290 = vmatprep.subr.mxu0 0.0
    %291 = vmatpush1.msra.mxu0 0.0
    %292 = vmatprep.subr.mxu0 0.0
    %293 = vmatpush1.msra.mxu0 %v264
    %294 = vmatprep.subr.mxu0 0.0
    %295 = vmatpush1.msra.mxu0 %v263
    %296 = vmatprep.subr.mxu0 0.0
    %297 = vmatpush1.msra.mxu0 %v262
    %298 = vmatprep.subr.mxu0 0.0
    %299 = vmatpush1.msra.mxu0 %v261
    %300 = vmatprep.subr.mxu0 0.0
    %301 = vmatpush2.msra.mxu0 0.0
    %302 = vmatprep.subr.mxu0 0.0
    %303 = vmatpush2.msra.mxu0 0.0
    %304 = vmatprep.subr.mxu0 0.0
    %305 = vmatpush2.msra.mxu0 0.0
    %306 = vmatprep.subr.mxu0 0.0
    %307 = vmatpush2.msra.mxu0 0.0
    %308 = vmatprep.subr.mxu0 0.0
    %309 = vmatpush2.msra.mxu0 0.0
    %310 = vmatprep.subr.mxu0 0.0
    %311 = vmatpush2.msra.mxu0 0.0
    %312 = vmatprep.subr.mxu0 0.0
    %313 = vmatpush2.msra.mxu0 0.0
    %314 = vmatprep.subr.mxu0 0.0
    %315 = vmatpush2.msra.mxu0 0.0
    %316 = vmatprep.subr.mxu0 0.0
    %317 = vmatpush2.msra.mxu0 0.0
    %318 = vmatprep.subr.mxu0 0.0
    %319 = vmatpush2.msra.mxu0 0.0
    %320 = vmatprep.subr.mxu0 0.0
    %321 = vmatpush2.msra.mxu0 0.0
    %322 = vmatprep.subr.mxu0 0.0
    %323 = vmatpush2.msra.mxu0 0.0
    %324 = vmatprep.subr.mxu0 0.0
    %325 = vmatpush2.msra.mxu0 0.0
    %326 = vmatprep.subr.mxu0 0.0
    %327 = vmatpush2.msra.mxu0 0.0
    %328 = vmatprep.subr.mxu0 0.0
    %329 = vmatpush2.msra.mxu0 0.0
    %330 = vmatprep.subr.mxu0 0.0
    %331 = vmatpush2.msra.mxu0 0.0
    %332 = vmatprep.mubr.f32.mxu0 0.0
    %333 = vmatmul.mubr.f32.gmra.mxu0 %v266
    %v334 = vpop.f32.mrf.mxu0
    %v335 = vadd.f32 0.0, %v334
    %v336 = vpop.f32.mrf.mxu0
    %337 = vdwg.mxu0
    %v338 = vadd.f32 %v257, %v335
    %v339 = vld [vmem:[%s6] sm:$0x1]
    %v341 = vlaneseq
    %v342 = vshrl.u32 %v341, 7
    %v343 = vsub.s32 0, %v342
    %v344 = vrot.slane %v339, %v343
    %v346 = vadd.f32 %v338, %v344
    %v347 = vmax.f32 %v346, 0.0
    %348 = vst [vmem:[#allocation13] sm:$0xff] %v347
    // Predicated region
    $region54: #{forward.1} parent=1 // pred_check
      _
    $region55: #{forward.1} parent=1 // pred_check_branch
      %350 = sbr.rel (0) target = $region57
    $region56: #{forward.1} parent=1 // pred_region
      %s352 = ssub.s32 128, 128
      %353 = vsyncadd [#allocation4], %s352
      %s355 = sshll.u32 [#allocation13], 4
      %s356 = int_to_ptr.vmem [resolvable:$true] %s355
      %358 = dma.vmem_to_hbm [thread:$0]  %s356, 128, %s7, [#allocation4]
    $region57: #{forward.1} parent=1 // pred_fallthru
      _
    // Predicated region
    $region58: #{forward.1} parent=1 // pred_check
      _
    $region59: #{forward.1} parent=1 // pred_check_branch
      %360 = sbr.rel (0) target = $region61
    $region60: #{forward.1} parent=1 // pred_region
      %361 = dma.done [#allocation4], 128
    $region61: #{forward.1} parent=1 // pred_fallthru
      _
    %362 = vsyncpa [#allocation3], 1
    %363 = vsyncpa [#allocation6], 1
    %364 = vsyncpa [#allocation9], 1
    %365 = vsyncpa [#allocation12], 1
    %366 = vsyncpa [#allocation4], 1

</llo_original>
